<compile_context>
chip_gen: v7x
topology: tpu7x:2x2x1
jax: 0.10.0
libtpu: 0.0.40
codegen_flags: <defaults>
</compile_context>

<pallas_src>
import numpy as np
import jax
import jax.numpy as jnp
from jax import lax
from jax.experimental import pallas as pl
from jax.experimental.pallas import tpu as pltpu

EMBED_DIM = 32     # embed_dim (small test size, torch default 768)
LSTM_DIM = 16      # lstm_dim  (small test size, torch default 384)
N_CLASSES = 12
SEQ_LEN = 8
BATCH = 2
VOCAB = 50
LANE = 128
SUBBATCH = 16      # padded per-step row count (bf16 packed-tile height; >= 8 sublanes)


def supertagger_forward(f0, pool, kw):
    """f0: (B, T, E) encoder output (f32); pool: (B, T, T) per-batch averaging matrices."""
    B, T, E = f0.shape
    GP = kw["gp"]              # padded per-gate / hidden lane width (128 at toy, =H at prod)
    G4 = 4 * GP
    CPAD = kw["cpad"]
    C = kw["n_classes"]
    Bp = ((B + SUBBATCH - 1) // SUBBATCH) * SUBBATCH
    TBp = T * Bp

    # ---------------- Phase 1: per-batch pooling + fused input projections ----------------
    def proj_kernel(pool_ref, f0_ref, wihf_ref, wihb_ref, bf_ref, bb_ref,
                    xgf_ref, xgb_ref):
        # word-piece span averaging for this batch element: one small (T,T)@(T,E) matmul.
        # TODO(synk): at production sizes also feed pool/f0 as bf16 operands (f32 acc).
        pooled = jnp.dot(pool_ref[0], f0_ref[0], preferred_element_type=jnp.float32)
        pooled = pooled.astype(jnp.bfloat16)
        # per-direction input projections, f32 accumulate, biases (b_ih + b_hh) folded in.
        xgf = jnp.dot(pooled, wihf_ref[...], preferred_element_type=jnp.float32) + bf_ref[...]
        xgb = jnp.dot(pooled, wihb_ref[...], preferred_element_type=jnp.float32) + bb_ref[...]
        xgf_ref[0] = xgf.astype(xgf_ref.dtype)
        xgb_ref[0] = xgb.astype(xgb_ref.dtype)

    xg_shape = jax.ShapeDtypeStruct((B, T, G4), jnp.bfloat16)
    xgf, xgb = pl.pallas_call(
        proj_kernel,
        out_shape=(xg_shape, xg_shape),
        grid_spec=pltpu.PrefetchScalarGridSpec(
            num_scalar_prefetch=0,
            grid=(B,),                                   # batch axis, embarrassingly parallel
            in_specs=[
                pl.BlockSpec((1, T, T), lambda b: (b, 0, 0)),   # pool[b]
                pl.BlockSpec((1, T, E), lambda b: (b, 0, 0)),   # f0[b]
                pl.BlockSpec((E, G4), lambda b: (0, 0)),        # W_ih fwd (bf16, gate-padded)
                pl.BlockSpec((E, G4), lambda b: (0, 0)),        # W_ih bwd
                pl.BlockSpec((1, G4), lambda b: (0, 0)),        # bias fwd (f32)
                pl.BlockSpec((1, G4), lambda b: (0, 0)),        # bias bwd
            ],
            out_specs=[
                pl.BlockSpec((1, T, G4), lambda b: (b, 0, 0)),
                pl.BlockSpec((1, T, G4), lambda b: (b, 0, 0)),
            ],
        ),
        compiler_params=pltpu.CompilerParams(dimension_semantics=("parallel",)),
        # TODO(synk): at production TB, tile this phase over 512-1024 row blocks (v6e) /
        # smaller on v7x, and split the batch across v7x's two TensorCores.
    )(pool, f0, kw["wihf"], kw["wihb"], kw["bf"], kw["bb"])

    # layout plumbing only: batch-major (B,T,4GP) -> padded time-major rows (T*Bp, 4GP).
    def to_time_major(x):
        x = jnp.transpose(x, (1, 0, 2))                          # (T, B, 4GP)
        if Bp > B:
            x = jnp.concatenate([x, jnp.zeros((T, Bp - B, G4), x.dtype)], axis=1)
        return x.reshape(TBp, G4)

    xgf_tm = to_time_major(xgf)
    xgb_tm = to_time_major(xgb)

    # ---------------- Phase 2: bidirectional recurrence + linear head ----------------
    def lstm_head_kernel(xgf_ref, xgb_ref, whhf_ref, whhb_ref,
                         wtop_ref, wbot_ref, blin_ref, out_ref, hf_ref, hb_ref):
        # TODO(synk): at production sizes use bf16 operands for the recurrent matmuls too
        # (f32 accumulation / gate math) and stream xg row blocks via double-buffered
        # make_async_copy instead of keeping the full (T*Bp, 4GP) slabs resident.
        whh_f = whhf_ref[...]                                    # (GP, 4GP), fwd only
        whh_b = whhb_ref[...]                                    # (GP, 4GP), bwd only
        h_f = jnp.zeros((Bp, GP), jnp.float32); c_f = jnp.zeros((Bp, GP), jnp.float32)
        h_b = jnp.zeros((Bp, GP), jnp.float32); c_b = jnp.zeros((Bp, GP), jnp.float32)
        # Fully unrolled: T is small & static, so every slab offset below is a
        # compile-time constant multiple of Bp (sublane/tile aligned, unmasked).
        # TODO(synk): at production T switch to lax.fori_loop(..., unroll=4..8).
        for s in range(T):
            xf = xgf_ref[pl.ds(s * Bp, Bp), :].astype(jnp.float32)          # gates x @ W_ih, t=s
            xb = xgb_ref[pl.ds((T - 1 - s) * Bp, Bp), :].astype(jnp.float32)  # t=T-1-s
            gf = xf + jnp.dot(h_f, whh_f, preferred_element_type=jnp.float32)  # (Bp, 4GP)
            gb = xb + jnp.dot(h_b, whh_b, preferred_element_type=jnp.float32)
            # band-sliced activations: each 128-lane gate band gets exactly one EUP op.
            i_f = jax.nn.sigmoid(gf[:, 0 * GP:1 * GP])
            f_f = jax.nn.sigmoid(gf[:, 1 * GP:2 * GP])
            g_f = jnp.tanh(gf[:, 2 * GP:3 * GP])
            o_f = jax.nn.sigmoid(gf[:, 3 * GP:4 * GP])
            c_f = f_f * c_f + i_f * g_f
            h_f = o_f * jnp.tanh(c_f)
            i_b = jax.nn.sigmoid(gb[:, 0 * GP:1 * GP])
            f_b = jax.nn.sigmoid(gb[:, 1 * GP:2 * GP])
            g_b = jnp.tanh(gb[:, 2 * GP:3 * GP])
            o_b = jax.nn.sigmoid(gb[:, 3 * GP:4 * GP])
            c_b = f_b * c_b + i_b * g_b
            h_b = o_b * jnp.tanh(c_b)
            hf_ref[pl.ds(s * Bp, Bp), :] = h_f.astype(hf_ref.dtype)          # h_fwd(t=s)
            hb_ref[pl.ds((T - 1 - s) * Bp, Bp), :] = h_b.astype(hb_ref.dtype)  # h_bwd(t=T-1-s)

        # linear head without lane concat: hs_fwd @ W_top + hs_bwd @ W_bot + b.
        out_ref[...] = (
            jnp.dot(hf_ref[...], wtop_ref[...], preferred_element_type=jnp.float32)
            + jnp.dot(hb_ref[...], wbot_ref[...], preferred_element_type=jnp.float32)
            + blin_ref[...]).astype(out_ref.dtype)

    def full(shape):
        return pl.BlockSpec(shape, lambda i: (0,) * len(shape))

    out_flat = pl.pallas_call(
        lstm_head_kernel,
        out_shape=jax.ShapeDtypeStruct((TBp, CPAD), jnp.float32),
        grid_spec=pltpu.PrefetchScalarGridSpec(
            num_scalar_prefetch=0,
            grid=(1,),
            in_specs=[full((TBp, G4)), full((TBp, G4)),
                      full((GP, G4)), full((GP, G4)),
                      full((GP, CPAD)), full((GP, CPAD)), full((1, CPAD))],
            out_specs=full((TBp, CPAD)),
            scratch_shapes=[pltpu.VMEM((TBp, GP), jnp.bfloat16),   # forward hidden states
                            pltpu.VMEM((TBp, GP), jnp.bfloat16)],  # backward hidden states
        ),
        compiler_params=pltpu.CompilerParams(dimension_semantics=("arbitrary",)),
    )(xgf_tm, xgb_tm, kw["whhf"], kw["whhb"], kw["wtop"], kw["wbot"], kw["blin"])

    # layout plumbing: un-flatten rows (t*Bp + b), drop batch & class padding.
    return out_flat.reshape(T, Bp, CPAD)[:, :B, :C].transpose(1, 0, 2)


def init_params(key):
    ks = jax.random.split(key, 9)
    H, E, C = LSTM_DIM, EMBED_DIM, N_CLASSES

    def u(k, shape, scale=0.1):
        return jax.random.uniform(k, shape, jnp.float32, -scale, scale)

    return dict(
        w_ih_f_T=u(ks[0], (E, 4 * H)),
        w_hh_f_T=u(ks[1], (H, 4 * H)),
        b_f=u(ks[2], (1, 4 * H)),          # b_ih + b_hh combined (fwd)
        w_ih_b_T=u(ks[3], (E, 4 * H)),
        w_hh_b_T=u(ks[4], (H, 4 * H)),
        b_b=u(ks[5], (1, 4 * H)),
        w_lin_T=u(ks[6], (2 * H, C)),
        b_lin=u(ks[7], (1, C)),
        embed=u(ks[8], (VOCAB, E), 1.0),
    )


def build_kernel_weights(params):
    """Host-side weight padding for the kernel layout: per-direction [i,f,g,o] banks,
    each gate band padded to GP=128 lanes (free at production H=384)."""
    H, E = LSTM_DIM, EMBED_DIM
    C = params["w_lin_T"].shape[1]
    GP = ((H + LANE - 1) // LANE) * LANE
    CPAD = ((C + LANE - 1) // LANE) * LANE
    G4 = 4 * GP

    def pad_gate_cols(w):                       # (rows, 4H) -> (rows, 4*GP)
        w = np.asarray(w, np.float32)
        out = np.zeros((w.shape[0], G4), np.float32)
        for g in range(4):                      # PyTorch gate order i, f, g, o
            out[:, g * GP:g * GP + H] = w[:, g * H:(g + 1) * H]
        return out

    wihf = pad_gate_cols(params["w_ih_f_T"])                    # (E, 4GP)
    wihb = pad_gate_cols(params["w_ih_b_T"])
    whhf = np.zeros((GP, G4), np.float32)
    whhf[:H] = pad_gate_cols(params["w_hh_f_T"])                # (GP, 4GP), fwd only
    whhb = np.zeros((GP, G4), np.float32)
    whhb[:H] = pad_gate_cols(params["w_hh_b_T"])
    bf = pad_gate_cols(params["b_f"])                           # (1, 4GP)
    bb = pad_gate_cols(params["b_b"])

    wlin = np.asarray(params["w_lin_T"], np.float32)            # (2H, C)
    wtop = np.zeros((GP, CPAD), np.float32); wtop[:H, :C] = wlin[:H]
    wbot = np.zeros((GP, CPAD), np.float32); wbot[:H, :C] = wlin[H:]
    blin = np.zeros((1, CPAD), np.float32); blin[0, :C] = np.asarray(params["b_lin"])[0]

    return dict(
        wihf=jnp.asarray(wihf, jnp.bfloat16), wihb=jnp.asarray(wihb, jnp.bfloat16),
        bf=jnp.asarray(bf), bb=jnp.asarray(bb),
        whhf=jnp.asarray(whhf), whhb=jnp.asarray(whhb),
        wtop=jnp.asarray(wtop, jnp.bfloat16), wbot=jnp.asarray(wbot, jnp.bfloat16),
        blin=jnp.asarray(blin),
        gp=int(GP), cpad=int(CPAD), n_classes=int(C))


def build_pool_matrices(word_piece_tracked, T):
    """Per-batch averaging matrices reproducing the in-place span-average loop
    (rows beyond the tracked word count stay identity = untouched)."""
    P = np.zeros((len(word_piece_tracked), T, T), np.float32)
    for i, wpt in enumerate(word_piece_tracked):
        P[i] = np.eye(T, dtype=np.float32)
        k = 0
        for j, n in enumerate(wpt):
            P[i, j, :] = 0.0
            P[i, j, k:k + n] = 1.0 / n
            k += n
    return jnp.asarray(P)


def reference(f0, pool, params):
    """Pure-JAX reference (matches PyTorch LSTM/Linear semantics, original params)."""
    H = LSTM_DIM
    pooled = jnp.einsum('bij,bje->bie', pool, f0)

    def lstm_dir(x, w_ih_T, w_hh_T, b, reverse):
        xp = x @ w_ih_T + b[0]
        if reverse:
            xp = xp[::-1]

        def step(carry, xt):
            h, c = carry
            gates = xt + h @ w_hh_T
            i = jax.nn.sigmoid(gates[0 * H:1 * H])
            f = jax.nn.sigmoid(gates[1 * H:2 * H])
            g = jnp.tanh(gates[2 * H:3 * H])
            o = jax.nn.sigmoid(gates[3 * H:4 * H])
            c = f * c + i * g
            h = o * jnp.tanh(c)
            return (h, c), h

        _, hs = lax.scan(step, (jnp.zeros(H), jnp.zeros(H)), xp)
        if reverse:
            hs = hs[::-1]
        return hs

    def per_batch(x):
        hf = lstm_dir(x, params["w_ih_f_T"], params["w_hh_f_T"], params["b_f"], False)
        hb = lstm_dir(x, params["w_ih_b_T"], params["w_hh_b_T"], params["b_b"], True)
        hcat = jnp.concatenate([hf, hb], axis=-1)
        return hcat @ params["w_lin_T"] + params["b_lin"][0]

    return jax.vmap(per_batch)(pooled)


if __name__ == "__main__":
    key = jax.random.PRNGKey(0)
    pkey, dkey = jax.random.split(key)
    params = init_params(pkey)
    kw = build_kernel_weights(params)

    encoded_batch = jax.random.randint(dkey, (BATCH, SEQ_LEN), 0, VOCAB)
    mask = jnp.ones((BATCH, SEQ_LEN), jnp.float32)
    word_piece_tracked = [[2, 1, 2, 1], [1, 3, 1, 2]]

    # TODO(synk): the pretrained BERT encoder (BertModel.from_pretrained) is not
    # reimplemented; its last_hidden_state is substituted by a deterministic
    # embedding lookup so the downstream kernel path is exercised end-to-end.
    f0 = params["embed"][encoded_batch] * mask[..., None]        # (B, T, E)
    pool = build_pool_matrices(word_piece_tracked, SEQ_LEN)      # (B, T, T)

    out = supertagger_forward(f0, pool, kw)
    out = jax.block_until_ready(out)

    ref = reference(f0, pool, params)
    np.testing.assert_allclose(np.asarray(out), np.asarray(ref), rtol=2e-2, atol=2e-2)
    print("KERNEL_OK")
</pallas_src>

<mosaic_0001>
module attributes {stable_mosaic.version = 11 : i64} {
  func.func @proj_kernel(%arg0: i32, %arg1: memref<1x8x8xf32, #tpu.memory_space<vmem>>, %arg2: memref<1x8x32xf32, #tpu.memory_space<vmem>>, %arg3: memref<32x512xbf16, #tpu.memory_space<vmem>>, %arg4: memref<32x512xbf16, #tpu.memory_space<vmem>>, %arg5: memref<1x512xf32, #tpu.memory_space<vmem>>, %arg6: memref<1x512xf32, #tpu.memory_space<vmem>>, %arg7: memref<1x8x512xbf16, #tpu.memory_space<vmem>>, %arg8: memref<1x8x512xbf16, #tpu.memory_space<vmem>>) attributes {dimension_semantics = [#tpu.dimension_semantics<parallel>], iteration_bounds = array<i64: 2>, scalar_prefetch = 0 : i64, scratch_operands = 0 : i64, tpu.core_type = #tpu.core_type<tc>, window_params = [{transform_indices = @transform_0, window_bounds = array<i64: 1, 8, 8>}, {transform_indices = @transform_1, window_bounds = array<i64: 1, 8, 32>}, {pipeline_mode = #tpu.pipeline_mode<synchronous>, transform_indices = @transform_2, window_bounds = array<i64: 32, 512>}, {pipeline_mode = #tpu.pipeline_mode<synchronous>, transform_indices = @transform_3, window_bounds = array<i64: 32, 512>}, {pipeline_mode = #tpu.pipeline_mode<synchronous>, transform_indices = @transform_4, window_bounds = array<i64: 1, 512>}, {pipeline_mode = #tpu.pipeline_mode<synchronous>, transform_indices = @transform_5, window_bounds = array<i64: 1, 512>}, {transform_indices = @transform_6, window_bounds = array<i64: 1, 8, 512>}, {transform_indices = @transform_7, window_bounds = array<i64: 1, 8, 512>}]} {
    %c0 = arith.constant 0 : index
    %c0_0 = arith.constant 0 : index
    %c0_1 = arith.constant 0 : index
    %0 = vector.load %arg1[%c0, %c0_0, %c0_1] : memref<1x8x8xf32, #tpu.memory_space<vmem>>, vector<1x8x8xf32>
    %1 = vector.shape_cast %0 : vector<1x8x8xf32> to vector<8x8xf32>
    %c0_2 = arith.constant 0 : index
    %c0_3 = arith.constant 0 : index
    %c0_4 = arith.constant 0 : index
    %2 = vector.load %arg2[%c0_2, %c0_3, %c0_4] : memref<1x8x32xf32, #tpu.memory_space<vmem>>, vector<1x8x32xf32>
    %3 = vector.shape_cast %2 : vector<1x8x32xf32> to vector<8x32xf32>
    %cst = arith.constant dense<0.000000e+00> : vector<8x32xf32>
    %4 = tpu.matmul %1, %3, %cst {dimension_numbers = #tpu.dot_dimension_numbers<[1], [0], [0], [1], [0, 0, 1, 1], [], []>} : vector<8x8xf32>, vector<8x32xf32>, vector<8x32xf32> -> vector<8x32xf32>
    %5 = arith.truncf %4 : vector<8x32xf32> to vector<8x32xbf16>
    %c0_5 = arith.constant 0 : index
    %c0_6 = arith.constant 0 : index
    %6 = vector.load %arg3[%c0_5, %c0_6] : memref<32x512xbf16, #tpu.memory_space<vmem>>, vector<32x512xbf16>
    %cst_7 = arith.constant dense<0.000000e+00> : vector<8x512xf32>
    %7 = tpu.matmul %5, %6, %cst_7 {dimension_numbers = #tpu.dot_dimension_numbers<[1], [0], [0], [1], [0, 0, 1, 1], [], []>} : vector<8x32xbf16>, vector<32x512xbf16>, vector<8x512xf32> -> vector<8x512xf32>
    %c0_8 = arith.constant 0 : index
    %c0_9 = arith.constant 0 : index
    %8 = vector.load %arg5[%c0_8, %c0_9] : memref<1x512xf32, #tpu.memory_space<vmem>>, vector<1x512xf32>
    %9 = vector.broadcast %8 : vector<1x512xf32> to vector<8x512xf32>
    %10 = arith.addf %7, %9 : vector<8x512xf32>
    %c0_10 = arith.constant 0 : index
    %c0_11 = arith.constant 0 : index
    %11 = vector.load %arg4[%c0_10, %c0_11] : memref<32x512xbf16, #tpu.memory_space<vmem>>, vector<32x512xbf16>
    %cst_12 = arith.constant dense<0.000000e+00> : vector<8x512xf32>
    %12 = tpu.matmul %5, %11, %cst_12 {dimension_numbers = #tpu.dot_dimension_numbers<[1], [0], [0], [1], [0, 0, 1, 1], [], []>} : vector<8x32xbf16>, vector<32x512xbf16>, vector<8x512xf32> -> vector<8x512xf32>
    %c0_13 = arith.constant 0 : index
    %c0_14 = arith.constant 0 : index
    %13 = vector.load %arg6[%c0_13, %c0_14] : memref<1x512xf32, #tpu.memory_space<vmem>>, vector<1x512xf32>
    %14 = vector.broadcast %13 : vector<1x512xf32> to vector<8x512xf32>
    %15 = arith.addf %12, %14 : vector<8x512xf32>
    %16 = arith.truncf %10 : vector<8x512xf32> to vector<8x512xbf16>
    %c0_15 = arith.constant 0 : index
    %c0_16 = arith.constant 0 : index
    %c0_17 = arith.constant 0 : index
    %17 = vector.load %arg7[%c0_15, %c0_16, %c0_17] : memref<1x8x512xbf16, #tpu.memory_space<vmem>>, vector<1x8x512xbf16>
    %18 = vector.shape_cast %17 : vector<1x8x512xbf16> to vector<8x512xbf16>
    %19 = vector.shape_cast %16 : vector<8x512xbf16> to vector<1x8x512xbf16>
    tpu.vector_store %arg7[%c0_15, %c0_16, %c0_17], %19 {strides = array<i32>} : memref<1x8x512xbf16, #tpu.memory_space<vmem>>, vector<1x8x512xbf16>,
    %20 = arith.truncf %15 : vector<8x512xf32> to vector<8x512xbf16>
    %c0_18 = arith.constant 0 : index
    %c0_19 = arith.constant 0 : index
    %c0_20 = arith.constant 0 : index
    %21 = vector.load %arg8[%c0_18, %c0_19, %c0_20] : memref<1x8x512xbf16, #tpu.memory_space<vmem>>, vector<1x8x512xbf16>
    %22 = vector.shape_cast %21 : vector<1x8x512xbf16> to vector<8x512xbf16>
    %23 = vector.shape_cast %20 : vector<8x512xbf16> to vector<1x8x512xbf16>
    tpu.vector_store %arg8[%c0_18, %c0_19, %c0_20], %23 {strides = array<i32>} : memref<1x8x512xbf16, #tpu.memory_space<vmem>>, vector<1x8x512xbf16>,
    return
  }
  func.func @transform_0(%arg0: i32) -> (i32, i32, i32) {
    %c0_i32 = arith.constant 0 : i32
    %c0_i32_0 = arith.constant 0 : i32
    %c0_i32_1 = arith.constant 0 : i32
    return %arg0, %c0_i32, %c0_i32_0 : i32, i32, i32
  }
  func.func @transform_1(%arg0: i32) -> (i32, i32, i32) {
    %c0_i32 = arith.constant 0 : i32
    %c0_i32_0 = arith.constant 0 : i32
    %c0_i32_1 = arith.constant 0 : i32
    return %arg0, %c0_i32, %c0_i32_0 : i32, i32, i32
  }
  func.func @transform_2(%arg0: i32) -> (i32, i32) {
    %c0_i32 = arith.constant 0 : i32
    %c0_i32_0 = arith.constant 0 : i32
    %c0_i32_1 = arith.constant 0 : i32
    return %c0_i32, %c0_i32_0 : i32, i32
  }
  func.func @transform_3(%arg0: i32) -> (i32, i32) {
    %c0_i32 = arith.constant 0 : i32
    %c0_i32_0 = arith.constant 0 : i32
    %c0_i32_1 = arith.constant 0 : i32
    return %c0_i32, %c0_i32_0 : i32, i32
  }
  func.func @transform_4(%arg0: i32) -> (i32, i32) {
    %c0_i32 = arith.constant 0 : i32
    %c0_i32_0 = arith.constant 0 : i32
    %c0_i32_1 = arith.constant 0 : i32
    return %c0_i32, %c0_i32_0 : i32, i32
  }
  func.func @transform_5(%arg0: i32) -> (i32, i32) {
    %c0_i32 = arith.constant 0 : i32
    %c0_i32_0 = arith.constant 0 : i32
    %c0_i32_1 = arith.constant 0 : i32
    return %c0_i32, %c0_i32_0 : i32, i32
  }
  func.func @transform_6(%arg0: i32) -> (i32, i32, i32) {
    %c0_i32 = arith.constant 0 : i32
    %c0_i32_0 = arith.constant 0 : i32
    %c0_i32_1 = arith.constant 0 : i32
    return %arg0, %c0_i32, %c0_i32_0 : i32, i32, i32
  }
  func.func @transform_7(%arg0: i32) -> (i32, i32, i32) {
    %c0_i32 = arith.constant 0 : i32
    %c0_i32_0 = arith.constant 0 : i32
    %c0_i32_1 = arith.constant 0 : i32
    return %arg0, %c0_i32, %c0_i32_0 : i32, i32, i32
  }
}

</mosaic_0001>

<llo_original>
// kernel: tpu_custom_call.1
$region0: #{tpu_custom_call.1}
  #allocation0 [shape = 'u32[]', space=smem, size = 0x4, offset = 0x4, fixed_abs, tag = 'smem constant byte address 0x4 - core index']
  #allocation1 [shape = 'u32[144,128]{1,0:T(1,128)}', space=vmem, size = 0x12000, scoped, tag = 'internal scratch']
  %s0 = inlined_call_operand.hbm [shape: f32[2,8,8], index: 0, kind: input, shape index: {}]
  %s1 = inlined_call_operand.hbm [shape: f32[2,8,32], index: 1, kind: input, shape index: {}]
  %s2 = inlined_call_operand.hbm [shape: bf16[32,512], index: 2, kind: input, shape index: {}]
  %s3 = inlined_call_operand.hbm [shape: bf16[32,512], index: 3, kind: input, shape index: {}]
  %s4 = inlined_call_operand.vmem [shape: f32[1,512], index: 4, kind: input, shape index: {}]
  %s5 = inlined_call_operand.vmem [shape: f32[1,512], index: 5, kind: input, shape index: {}]
  %s6 = inlined_call_operand.hbm [shape: bf16[2,8,512], index: 6, kind: output, shape index: {0}]
  %s7 = inlined_call_operand.hbm [shape: bf16[2,8,512], index: 7, kind: output, shape index: {1}]
  %8 = xla_tuple %s6, %s7
  %s9 = sld [smem:[#allocation0]]
  $region81: #{tpu_custom_call.1} parent=0
    _
  %s11 = ssub.s32 1, %s9
  %s12 = scalar_select 0, %s11, %s9
  $region1: #{tpu_custom_call.1} parent=0
    #allocation2 [shape = 'u8[8192]{0}', space=vmem, size = 0x2000, scoped, tag = 'input window, operand 0']
    #allocation3 [shape = 's32[2]{0}', space=sflag, size = 0x8, scoped, tag = 'scoped memory for tpu_custom_call.1']
    #allocation4 [shape = 's32[2]{0}', space=sflag, size = 0x8, scoped, tag = 'scoped memory for tpu_custom_call.1']
    #allocation5 [shape = 'u8[8192]{0}', space=vmem, size = 0x2000, scoped, tag = 'input window, operand 1']
    #allocation6 [shape = 's32[2]{0}', space=sflag, size = 0x8, scoped, tag = 'scoped memory for tpu_custom_call.1']
    #allocation7 [shape = 'u8[32768]{0}', space=vmem, size = 0x8000, scoped, tag = 'input window, operand 2, single buffered']
    #allocation8 [shape = 'u8[32768]{0}', space=vmem, size = 0x8000, scoped, tag = 'input window, operand 3, single buffered']
    #allocation9 [shape = 's32[1]{0}', space=sflag, size = 0x4, scoped, tag = 'scoped memory for tpu_custom_call.1']
    #allocation10 [shape = 'u8[16384]{0}', space=vmem, size = 0x4000, scoped, tag = 'output window, operand 0']
    #allocation11 [shape = 'u8[16384]{0}', space=vmem, size = 0x4000, scoped, tag = 'output window, operand 1']
    #allocation12 [shape = 's32[2]{0}', space=sflag, size = 0x8, scoped, tag = 'scoped memory for tpu_custom_call.1']
    %13 = vsyncpa [#allocation3], 0
    %s14 = scalar_lea.sflag [#allocation3], 1
    %15 = vsyncpa %s14, 0
    %16 = vsyncpa [#allocation6], 0
    %s17 = scalar_lea.sflag [#allocation6], 1
    %18 = vsyncpa %s17, 0
    %19 = vsyncpa [#allocation9], 0
    %20 = vsyncpa [#allocation4], 0
    %s21 = scalar_lea.sflag [#allocation4], 1
    %22 = vsyncpa %s21, 0
    %23 = vsyncpa [#allocation12], 0
    %s24 = scalar_lea.sflag [#allocation12], 1
    %25 = vsyncpa %s24, 0
    loop: start=0, step=1, limit=4
    $region2: #{tpu_custom_call.1} parent=1 // loop_pre_header
      _
    $region3: #{tpu_custom_call.1} parent=1 // loop_header
      %s27 = sphi 0, %s31
      %p28 = scmp.ge.s32.totalorder %s27, 4
      %s37 = sphi 0, %s39
      %s40 = sphi 0, %s37
      %s41 = sphi 0, %s40
      %s57 = sphi 0, %s41
      %s63 = sphi 0, %s65
      %s66 = sphi 0, %s63
      %s67 = sphi 0, %s66
      %s83 = sphi 0, %s67
      %s87 = sphi 0, %s87
      %s89 = sphi 0, %s87
      %s90 = sphi 0, %s89
      %s104 = sphi 0, %s90
      %s108 = sphi 0, %s108
      %s110 = sphi 0, %s108
      %s111 = sphi 0, %s110
      %s125 = sphi 0, %s111
      %s129 = sphi 0, %s129
      %s131 = sphi 0, %s129
      %s132 = sphi 0, %s131
      %s146 = sphi 0, %s132
      %s150 = sphi 0, %s150
      %s152 = sphi 0, %s150
      %s153 = sphi 0, %s152
      %s167 = sphi 0, %s153
      %s173 = sphi 0, %s175
      %s176 = sphi 0, %s173
      %s177 = sphi 0, %s176
      %s193 = sphi 0, %s177
      %s199 = sphi 0, %s201
      %s202 = sphi 0, %s199
      %s203 = sphi 0, %s202
      %s219 = sphi 0, %s203
    $region4: #{tpu_custom_call.1} parent=1 // loop_header_branch
      %30 = sbr.rel (%p28) target = $region8
    $region5: #{tpu_custom_call.1} parent=1 // loop_body
      %s32 = ssub.s32 %s27, 1
      %s33 = ssub.s32 %s27, 2
      %s34 = sadd.s32 %s27, 1
      %s35 = ssub.s32 %s27, %s34
      %p36 = scmp.eq.s32.totalorder %s35, 0
      %s38 = sadd.s32 %s37, 1
      %s39 = scalar_select %p36, %s37, %s38
      %p42 = pneg %p36
      %p43 = scmp.eq.s32.totalorder %s27, 1
      %p44 = por %p42, %p43
      %p45 = scmp.ne.s32.totalorder %s37, %s40
      %p46 = scmp.eq.s32.totalorder %s27, 0
      %p47 = por %p45, %p46
      %p48 = scmp.ne.s32.totalorder %s37, %s40
      %p49 = scmp.eq.s32.totalorder %s32, 1
      %p50 = por %p48, %p49
      %p51 = scmp.ne.s32.totalorder %s40, %s41
      %p52 = scmp.eq.s32.totalorder %s32, 0
      %p53 = por %p51, %p52
      %p54 = scmp.ne.s32.totalorder %s40, %s41
      %p55 = scmp.eq.s32.totalorder %s33, 1
      %p56 = por %p54, %p55
      %p58 = scmp.ne.s32.totalorder %s41, %s57
      %p59 = scmp.eq.s32.totalorder %s33, 0
      %p60 = por %p58, %p59
      %s61 = ssub.s32 %s27, %s34
      %p62 = scmp.eq.s32.totalorder %s61, 0
      %s64 = sadd.s32 %s63, 1
      %s65 = scalar_select %p62, %s63, %s64
      %p68 = pneg %p62
      %p69 = scmp.eq.s32.totalorder %s27, 1
      %p70 = por %p68, %p69
      %p71 = scmp.ne.s32.totalorder %s63, %s66
      %p72 = scmp.eq.s32.totalorder %s27, 0
      %p73 = por %p71, %p72
      %p74 = scmp.ne.s32.totalorder %s63, %s66
      %p75 = scmp.eq.s32.totalorder %s32, 1
      %p76 = por %p74, %p75
      %p77 = scmp.ne.s32.totalorder %s66, %s67
      %p78 = scmp.eq.s32.totalorder %s32, 0
      %p79 = por %p77, %p78
      %p80 = scmp.ne.s32.totalorder %s66, %s67
      %p81 = scmp.eq.s32.totalorder %s33, 1
      %p82 = por %p80, %p81
      %p84 = scmp.ne.s32.totalorder %s67, %s83
      %p85 = scmp.eq.s32.totalorder %s33, 0
      %p86 = por %p84, %p85
      %s88 = sadd.s32 %s87, 1
      %p91 = scmp.eq.s32.totalorder %s27, 1
      %p92 = scmp.ne.s32.totalorder %s87, %s89
      %p93 = scmp.eq.s32.totalorder %s27, 0
      %p94 = por %p92, %p93
      %p95 = scmp.ne.s32.totalorder %s87, %s89
      %p96 = scmp.eq.s32.totalorder %s32, 1
      %p97 = por %p95, %p96
      %p98 = scmp.ne.s32.totalorder %s89, %s90
      %p99 = scmp.eq.s32.totalorder %s32, 0
      %p100 = por %p98, %p99
      %p101 = scmp.ne.s32.totalorder %s89, %s90
      %p102 = scmp.eq.s32.totalorder %s33, 1
      %p103 = por %p101, %p102
      %p105 = scmp.ne.s32.totalorder %s90, %s104
      %p106 = scmp.eq.s32.totalorder %s33, 0
      %p107 = por %p105, %p106
      %s109 = sadd.s32 %s108, 1
      %p112 = scmp.eq.s32.totalorder %s27, 1
      %p113 = scmp.ne.s32.totalorder %s108, %s110
      %p114 = scmp.eq.s32.totalorder %s27, 0
      %p115 = por %p113, %p114
      %p116 = scmp.ne.s32.totalorder %s108, %s110
      %p117 = scmp.eq.s32.totalorder %s32, 1
      %p118 = por %p116, %p117
      %p119 = scmp.ne.s32.totalorder %s110, %s111
      %p120 = scmp.eq.s32.totalorder %s32, 0
      %p121 = por %p119, %p120
      %p122 = scmp.ne.s32.totalorder %s110, %s111
      %p123 = scmp.eq.s32.totalorder %s33, 1
      %p124 = por %p122, %p123
      %p126 = scmp.ne.s32.totalorder %s111, %s125
      %p127 = scmp.eq.s32.totalorder %s33, 0
      %p128 = por %p126, %p127
      %s130 = sadd.s32 %s129, 1
      %p133 = scmp.eq.s32.totalorder %s27, 1
      %p134 = scmp.ne.s32.totalorder %s129, %s131
      %p135 = scmp.eq.s32.totalorder %s27, 0
      %p136 = por %p134, %p135
      %p137 = scmp.ne.s32.totalorder %s129, %s131
      %p138 = scmp.eq.s32.totalorder %s32, 1
      %p139 = por %p137, %p138
      %p140 = scmp.ne.s32.totalorder %s131, %s132
      %p141 = scmp.eq.s32.totalorder %s32, 0
      %p142 = por %p140, %p141
      %p143 = scmp.ne.s32.totalorder %s131, %s132
      %p144 = scmp.eq.s32.totalorder %s33, 1
      %p145 = por %p143, %p144
      %p147 = scmp.ne.s32.totalorder %s132, %s146
      %p148 = scmp.eq.s32.totalorder %s33, 0
      %p149 = por %p147, %p148
      %s151 = sadd.s32 %s150, 1
      %p154 = scmp.eq.s32.totalorder %s27, 1
      %p155 = scmp.ne.s32.totalorder %s150, %s152
      %p156 = scmp.eq.s32.totalorder %s27, 0
      %p157 = por %p155, %p156
      %p158 = scmp.ne.s32.totalorder %s150, %s152
      %p159 = scmp.eq.s32.totalorder %s32, 1
      %p160 = por %p158, %p159
      %p161 = scmp.ne.s32.totalorder %s152, %s153
      %p162 = scmp.eq.s32.totalorder %s32, 0
      %p163 = por %p161, %p162
      %p164 = scmp.ne.s32.totalorder %s152, %s153
      %p165 = scmp.eq.s32.totalorder %s33, 1
      %p166 = por %p164, %p165
      %p168 = scmp.ne.s32.totalorder %s153, %s167
      %p169 = scmp.eq.s32.totalorder %s33, 0
      %p170 = por %p168, %p169
      %s171 = ssub.s32 %s27, %s34
      %p172 = scmp.eq.s32.totalorder %s171, 0
      %s174 = sadd.s32 %s173, 1
      %s175 = scalar_select %p172, %s173, %s174
      %p178 = pneg %p172
      %p179 = scmp.eq.s32.totalorder %s27, 1
      %p180 = por %p178, %p179
      %p181 = scmp.ne.s32.totalorder %s173, %s176
      %p182 = scmp.eq.s32.totalorder %s27, 0
      %p183 = por %p181, %p182
      %p184 = scmp.ne.s32.totalorder %s173, %s176
      %p185 = scmp.eq.s32.totalorder %s32, 1
      %p186 = por %p184, %p185
      %p187 = scmp.ne.s32.totalorder %s176, %s177
      %p188 = scmp.eq.s32.totalorder %s32, 0
      %p189 = por %p187, %p188
      %p190 = scmp.ne.s32.totalorder %s176, %s177
      %p191 = scmp.eq.s32.totalorder %s33, 1
      %p192 = por %p190, %p191
      %p194 = scmp.ne.s32.totalorder %s177, %s193
      %p195 = scmp.eq.s32.totalorder %s33, 0
      %p196 = por %p194, %p195
      %s197 = ssub.s32 %s27, %s34
      %p198 = scmp.eq.s32.totalorder %s197, 0
      %s200 = sadd.s32 %s199, 1
      %s201 = scalar_select %p198, %s199, %s200
      %p204 = pneg %p198
      %p205 = scmp.eq.s32.totalorder %s27, 1
      %p206 = por %p204, %p205
      %p207 = scmp.ne.s32.totalorder %s199, %s202
      %p208 = scmp.eq.s32.totalorder %s27, 0
      %p209 = por %p207, %p208
      %p210 = scmp.ne.s32.totalorder %s199, %s202
      %p211 = scmp.eq.s32.totalorder %s32, 1
      %p212 = por %p210, %p211
      %p213 = scmp.ne.s32.totalorder %s202, %s203
      %p214 = scmp.eq.s32.totalorder %s32, 0
      %p215 = por %p213, %p214
      %p216 = scmp.ne.s32.totalorder %s202, %s203
      %p217 = scmp.eq.s32.totalorder %s33, 1
      %p218 = por %p216, %p217
      %p220 = scmp.ne.s32.totalorder %s203, %s219
      %p221 = scmp.eq.s32.totalorder %s33, 0
      %p222 = por %p220, %p221
      %p223 = scmp.le.s32.totalorder 1, %s27
      %p224 = scmp.lt.s32.totalorder %s27, 3
      %p225 = pnand %p223, %p224
      %p226 = pneg %p225
      // Predicated region
      $region9: #{tpu_custom_call.1} parent=5 // pred_check
        _
      $region10: #{tpu_custom_call.1} parent=5 // pred_check_branch
        %228 = sbr.rel (%p225) target = $region12
      $region11: #{tpu_custom_call.1} parent=5 // pred_region
        %s229 = ssub.s32 %s27, 1
        // Predicated region
        $region13: #{tpu_custom_call.1} parent=11 // pred_check
          %p230 = pneg %p100
        $region14: #{tpu_custom_call.1} parent=11 // pred_check_branch
          %232 = sbr.rel (%p230) target = $region16
        $region15: #{tpu_custom_call.1} parent=11 // pred_region
          %s234 = ssub.s32 1024, 1024
          %235 = vsyncadd [#allocation6], %s234
          %s236 = sshll.u32 [#allocation7], 4
          %s237 = int_to_ptr.vmem [resolvable:$true] %s236
          %242 = dma.hbm_to_vmem [thread:$0]  %s2, 1024, %s237, [#allocation6], 256, 256, 16
        $region16: #{tpu_custom_call.1} parent=11 // pred_fallthru
          _
        // Predicated region
        $region17: #{tpu_custom_call.1} parent=11 // pred_check
          %p243 = pneg %p121
        $region18: #{tpu_custom_call.1} parent=11 // pred_check_branch
          %245 = sbr.rel (%p243) target = $region20
        $region19: #{tpu_custom_call.1} parent=11 // pred_region
          %s247 = ssub.s32 1024, 1024
          %248 = vsyncadd [#allocation9], %s247
          %s249 = sshll.u32 [#allocation8], 4
          %s250 = int_to_ptr.vmem [resolvable:$true] %s249
          %255 = dma.hbm_to_vmem [thread:$0]  %s3, 1024, %s250, [#allocation9], 256, 256, 16
        $region20: #{tpu_custom_call.1} parent=11 // pred_fallthru
          _
        // Predicated region
        $region21: #{tpu_custom_call.1} parent=11 // pred_check
          %p256 = pneg %p142
        $region22: #{tpu_custom_call.1} parent=11 // pred_check_branch
          %258 = sbr.rel (%p256) target = $region24
        $region23: #{tpu_custom_call.1} parent=11 // pred_region
          _
        $region24: #{tpu_custom_call.1} parent=11 // pred_fallthru
          _
        // Predicated region
        $region25: #{tpu_custom_call.1} parent=11 // pred_check
          %p259 = pneg %p163
        $region26: #{tpu_custom_call.1} parent=11 // pred_check_branch
          %261 = sbr.rel (%p259) target = $region28
        $region27: #{tpu_custom_call.1} parent=11 // pred_region
          _
        $region28: #{tpu_custom_call.1} parent=11 // pred_fallthru
          _
      $region12: #{tpu_custom_call.1} parent=5 // pred_fallthru
        _
      %p262 = scmp.lt.s32.totalorder %s27, 2
      // Predicated region
      $region29: #{tpu_custom_call.1} parent=5 // pred_check
        %p263 = pneg %p262
      $region30: #{tpu_custom_call.1} parent=5 // pred_check_branch
        %265 = sbr.rel (%p263) target = $region32
      $region31: #{tpu_custom_call.1} parent=5 // pred_region
        // Predicated region
        $region33: #{tpu_custom_call.1} parent=31 // pred_check
          %p266 = pneg %p47
        $region34: #{tpu_custom_call.1} parent=31 // pred_check_branch
          %268 = sbr.rel (%p266) target = $region36
        $region35: #{tpu_custom_call.1} parent=31 // pred_region
          %s269 = sand.u32 %s37, 1
          %s270 = scalar_lea.sflag [#allocation3], %s269
          %s271 = sand.u32 %s37, 1
          %s272 = smul.addr %s271, 8
          %s273 = scalar_lea.vmem [#allocation2], %s272
          %s275 = ssub.s32 128, 128
          %276 = vsyncadd %s270, %s275
          %s277 = smul.addr %s27, 128
          %s278 = scalar_lea.hbm %s0, %s277
          %s280 = sshll.u32 %s273, 4
          %s281 = int_to_ptr.vmem [resolvable:$true] %s280
          %283 = dma.hbm_to_vmem [thread:$0]  %s278, 128, %s281, %s270
        $region36: #{tpu_custom_call.1} parent=31 // pred_fallthru
          _
        // Predicated region
        $region37: #{tpu_custom_call.1} parent=31 // pred_check
          %p284 = pneg %p73
        $region38: #{tpu_custom_call.1} parent=31 // pred_check_branch
          %286 = sbr.rel (%p284) target = $region40
        $region39: #{tpu_custom_call.1} parent=31 // pred_region
          %s287 = sand.u32 %s27, 1
          %s288 = scalar_lea.sflag [#allocation6], %s287
          %s289 = sand.u32 %s63, 1
          %s290 = smul.addr %s289, 8
          %s291 = scalar_lea.vmem [#allocation5], %s290
          %s293 = ssub.s32 128, 128
          %294 = vsyncadd %s288, %s293
          %s295 = smul.addr %s27, 128
          %s296 = scalar_lea.hbm %s1, %s295
          %s298 = sshll.u32 %s291, 4
          %s299 = int_to_ptr.vmem [resolvable:$true] %s298
          %301 = dma.hbm_to_vmem [thread:$0]  %s296, 128, %s299, %s288
        $region40: #{tpu_custom_call.1} parent=31 // pred_fallthru
          _
      $region32: #{tpu_custom_call.1} parent=5 // pred_fallthru
        _
      %p302 = scmp.le.s32.totalorder 1, %s27
      %p303 = scmp.lt.s32.totalorder %s27, 3
      %p304 = pnand %p302, %p303
      %p305 = pneg %p304
      // Predicated region
      $region41: #{tpu_custom_call.1} parent=5 // pred_check
        _
      $region42: #{tpu_custom_call.1} parent=5 // pred_check_branch
        %307 = sbr.rel (%p304) target = $region44
      $region43: #{tpu_custom_call.1} parent=5 // pred_region
        %s308 = ssub.s32 %s27, 1
        %s309 = sand.u32 %s40, 1
        %s310 = scalar_lea.sflag [#allocation3], %s309
        %s311 = sand.u32 %s40, 1
        %s312 = smul.addr %s311, 8
        %s313 = scalar_lea.vmem [#allocation2], %s312
        // Predicated region
        $region45: #{tpu_custom_call.1} parent=43 // pred_check
          %p314 = pneg %p53
        $region46: #{tpu_custom_call.1} parent=43 // pred_check_branch
          %316 = sbr.rel (%p314) target = $region48
        $region47: #{tpu_custom_call.1} parent=43 // pred_region
          %317 = dma.done %s310, 128
        $region48: #{tpu_custom_call.1} parent=43 // pred_fallthru
          _
        %s318 = sand.u32 %s32, 1
        %s319 = scalar_lea.sflag [#allocation6], %s318
        %s320 = sand.u32 %s66, 1
        %s321 = smul.addr %s320, 8
        %s322 = scalar_lea.vmem [#allocation5], %s321
        // Predicated region
        $region49: #{tpu_custom_call.1} parent=43 // pred_check
          %p323 = pneg %p79
        $region50: #{tpu_custom_call.1} parent=43 // pred_check_branch
          %325 = sbr.rel (%p323) target = $region52
        $region51: #{tpu_custom_call.1} parent=43 // pred_region
          %326 = dma.done %s319, 128
        $region52: #{tpu_custom_call.1} parent=43 // pred_fallthru
          _
        // Predicated region
        $region53: #{tpu_custom_call.1} parent=43 // pred_check
          %p327 = pneg %p100
        $region54: #{tpu_custom_call.1} parent=43 // pred_check_branch
          %329 = sbr.rel (%p327) target = $region56
        $region55: #{tpu_custom_call.1} parent=43 // pred_region
          %330 = dma.done [#allocation6], 1024
        $region56: #{tpu_custom_call.1} parent=43 // pred_fallthru
          _
        // Predicated region
        $region57: #{tpu_custom_call.1} parent=43 // pred_check
          %p331 = pneg %p121
        $region58: #{tpu_custom_call.1} parent=43 // pred_check_branch
          %333 = sbr.rel (%p331) target = $region60
        $region59: #{tpu_custom_call.1} parent=43 // pred_region
          %334 = dma.done [#allocation9], 1024
        $region60: #{tpu_custom_call.1} parent=43 // pred_fallthru
          _
        %s335 = sand.u32 %s40, 1
        %s336 = scalar_lea.sflag [#allocation3], %s335
        %s337 = sand.u32 %s40, 1
        %s338 = smul.addr %s337, 8
        %s339 = scalar_lea.vmem [#allocation2], %s338
        %p340 = pneg %p53
        %p341 = pneg %p50
        %s342 = sand.u32 %s32, 1
        %s343 = scalar_lea.sflag [#allocation6], %s342
        %s344 = sand.u32 %s66, 1
        %s345 = smul.addr %s344, 8
        %s346 = scalar_lea.vmem [#allocation5], %s345
        %p347 = pneg %p79
        %p348 = pneg %p76
        %p349 = pneg %p100
        %p350 = pneg %p97
        %p351 = pneg %p121
        %p352 = pneg %p118
        %p353 = pneg %p142
        %p354 = pneg %p139
        %p355 = pneg %p163
        %p356 = pneg %p160
        %p357 = pneg %p189
        %p358 = pneg %p186
        %s359 = sand.u32 %s176, 1
        %s360 = scalar_lea.sflag [#allocation4], %s359
        %s361 = sand.u32 %s176, 1
        %s362 = smul.addr %s361, 16
        %s363 = scalar_lea.vmem [#allocation10], %s362
        %p364 = pneg %p215
        %p365 = pneg %p212
        %s366 = sand.u32 %s202, 1
        %s367 = scalar_lea.sflag [#allocation12], %s366
        %s368 = sand.u32 %s202, 1
        %s369 = smul.addr %s368, 16
        %s370 = scalar_lea.vmem [#allocation11], %s369
        %v372 = vld [vmem:[%s313] sm:$0xff]
        %v373 = vld [vmem:[%s322] sm:$0xff]
        %vm374 = vcmask 64512
        %v376 = vsel %vm374, %v372, 0
        %378 = vmatprep.subr.mxu0 0.0
        %379 = vmatpush1.msra.mxu0 %v373
        %380 = vmatprep.subr.mxu0 0.0
        %381 = vmatpush1.msra.mxu0 0.0
        %382 = vmatprep.subr.mxu0 0.0
        %383 = vmatpush1.msra.mxu0 0.0
        %384 = vmatprep.subr.mxu0 0.0
        %385 = vmatpush1.msra.mxu0 0.0
        %386 = vmatprep.subr.mxu0 0.0
        %387 = vmatpush1.msra.mxu0 0.0
        %388 = vmatprep.subr.mxu0 0.0
        %389 = vmatpush1.msra.mxu0 0.0
        %390 = vmatprep.subr.mxu0 0.0
        %391 = vmatpush1.msra.mxu0 0.0
        %392 = vmatprep.subr.mxu0 0.0
        %393 = vmatpush1.msra.mxu0 0.0
        %394 = vmatprep.subr.mxu0 0.0
        %395 = vmatpush1.msra.mxu0 0.0
        %396 = vmatprep.subr.mxu0 0.0
        %397 = vmatpush1.msra.mxu0 0.0
        %398 = vmatprep.subr.mxu0 0.0
        %399 = vmatpush1.msra.mxu0 0.0
        %400 = vmatprep.subr.mxu0 0.0
        %401 = vmatpush1.msra.mxu0 0.0
        %402 = vmatprep.subr.mxu0 0.0
        %403 = vmatpush1.msra.mxu0 0.0
        %404 = vmatprep.subr.mxu0 0.0
        %405 = vmatpush1.msra.mxu0 0.0
        %406 = vmatprep.subr.mxu0 0.0
        %407 = vmatpush1.msra.mxu0 0.0
        %408 = vmatprep.subr.mxu0 0.0
        %409 = vmatpush1.msra.mxu0 0.0
        %410 = vmatprep.subr.mxu0 0.0
        %411 = vmatpush1.msra.mxu0 0.0
        %412 = vmatprep.subr.mxu0 0.0
        %413 = vmatpush1.msra.mxu0 0.0
        %414 = vmatprep.subr.mxu0 0.0
        %415 = vmatpush1.msra.mxu0 0.0
        %416 = vmatprep.subr.mxu0 0.0
        %417 = vmatpush1.msra.mxu0 0.0
        %418 = vmatprep.subr.mxu0 0.0
        %419 = vmatpush1.msra.mxu0 0.0
        %420 = vmatprep.subr.mxu0 0.0
        %421 = vmatpush1.msra.mxu0 0.0
        %422 = vmatprep.subr.mxu0 0.0
        %423 = vmatpush1.msra.mxu0 0.0
        %424 = vmatprep.subr.mxu0 0.0
        %425 = vmatpush1.msra.mxu0 0.0
        %426 = vmatprep.subr.mxu0 0.0
        %427 = vmatpush1.msra.mxu0 0.0
        %428 = vmatprep.subr.mxu0 0.0
        %429 = vmatpush1.msra.mxu0 0.0
        %430 = vmatprep.subr.mxu0 0.0
        %431 = vmatpush1.msra.mxu0 0.0
        %432 = vmatprep.subr.mxu0 0.0
        %433 = vmatpush1.msra.mxu0 0.0
        %434 = vmatprep.subr.mxu0 0.0
        %435 = vmatpush1.msra.mxu0 0.0
        %436 = vmatprep.subr.mxu0 0.0
        %437 = vmatpush1.msra.mxu0 0.0
        %438 = vmatprep.subr.mxu0 0.0
        %439 = vmatpush1.msra.mxu0 0.0
        %440 = vmatprep.subr.mxu0 0.0
        %441 = vmatpush1.msra.mxu0 0.0
        %442 = vmatprep.mubr.f32.mxu0 0.0
        %443 = vmatmul.mubr.f32.gmra.mrb[0].mxu0 %v376
        %v444 = vpop.f32.mrb[0].mxu0
        %v445 = vadd.f32 0.0, %v444
        %v446 = vpop.f32.mrb[0].mxu0
        %447 = vdwg.mxu0
        %v448 = vpack.c.bf16 %v445, %v445
        %v449 = vld [vmem:[#allocation7] sm:$0xff]
        %v450 = vld [vmem:[#allocation7 + $0x8] sm:$0xff]
        %v451 = vld [vmem:[#allocation7 + $0x10] sm:$0xff]
        %v452 = vld [vmem:[#allocation7 + $0x18] sm:$0xff]
        %v453 = vld [vmem:[#allocation7 + $0x20] sm:$0xff]
        %v454 = vld [vmem:[#allocation7 + $0x28] sm:$0xff]
        %v455 = vld [vmem:[#allocation7 + $0x30] sm:$0xff]
        %v456 = vld [vmem:[#allocation7 + $0x38] sm:$0xff]
        %v457 = vld [vmem:[%s4] sm:$0xf]
        %v459 = vlaneseq
        %v460 = vshrl.u32 %v459, 7
        %v461 = vsub.s32 0, %v460
        %v462 = vrot.slane %v457, %v461
        %v463 = vlaneseq
        %v464 = vshrl.u32 %v463, 7
        %v465 = vsub.s32 1, %v464
        %v466 = vrot.slane %v457, %v465
        %v467 = vlaneseq
        %v468 = vshrl.u32 %v467, 7
        %v469 = vsub.s32 2, %v468
        %v470 = vrot.slane %v457, %v469
        %v471 = vlaneseq
        %v472 = vshrl.u32 %v471, 7
        %v473 = vsub.s32 3, %v472
        %v474 = vrot.slane %v457, %v473
        %v487 = vunpack.c.l.b16 %v449
        %v488 = vunpack.c.h.b16 %v449
        %v489 = vunpack.c.l.b16 %v450
        %v490 = vunpack.c.h.b16 %v450
        %v491 = vunpack.c.l.b16 %v451
        %v492 = vunpack.c.h.b16 %v451
        %v493 = vunpack.c.l.b16 %v452
        %v494 = vunpack.c.h.b16 %v452
        %v495 = vunpack.c.l.b16 %v453
        %v496 = vunpack.c.h.b16 %v453
        %v497 = vunpack.c.l.b16 %v454
        %v498 = vunpack.c.h.b16 %v454
        %v499 = vunpack.c.l.b16 %v455
        %v500 = vunpack.c.h.b16 %v455
        %v501 = vunpack.c.l.b16 %v456
        %v502 = vunpack.c.h.b16 %v456
        %v503 = vpack.c.b16 %v491, %v487
        %v504 = vpack.c.b16 %v492, %v488
        %v505 = vpack.c.b16 %v493, %v489
        %v506 = vpack.c.b16 %v494, %v490
        %v507 = vpack.c.b16 %v499, %v495
        %v508 = vpack.c.b16 %v500, %v496
        %v509 = vpack.c.b16 %v501, %v497
        %v510 = vpack.c.b16 %v502, %v498
        %vm519 = vcmask 261120
        %v521 = vsel %vm519, %v448, 0
        %523 = vmatprep.subr.bf16.mxu0 %v504
        %524 = vmatpush1.bf16.msra.mxu0 %v503
        %525 = vmatprep.subr.bf16.mxu0 %v508
        %526 = vmatpush1.bf16.msra.mxu0 %v507
        %527 = vmatprep.subr.bf16.mxu0 0
        %528 = vmatpush1.bf16.msra.mxu0 0
        %529 = vmatprep.subr.bf16.mxu0 0
        %530 = vmatpush1.bf16.msra.mxu0 0
        %531 = vmatprep.subr.bf16.mxu0 0
        %532 = vmatpush1.bf16.msra.mxu0 0
        %533 = vmatprep.subr.bf16.mxu0 0
        %534 = vmatpush1.bf16.msra.mxu0 0
        %535 = vmatprep.subr.bf16.mxu0 0
        %536 = vmatpush1.bf16.msra.mxu0 0
        %537 = vmatprep.subr.bf16.mxu0 0
        %538 = vmatpush1.bf16.msra.mxu0 0
        %539 = vmatprep.subr.bf16.mxu0 0
        %540 = vmatpush1.bf16.msra.mxu0 0
        %541 = vmatprep.subr.bf16.mxu0 0
        %542 = vmatpush1.bf16.msra.mxu0 0
        %543 = vmatprep.subr.bf16.mxu0 0
        %544 = vmatpush1.bf16.msra.mxu0 0
        %545 = vmatprep.subr.bf16.mxu0 0
        %546 = vmatpush1.bf16.msra.mxu0 0
        %547 = vmatprep.subr.bf16.mxu0 0
        %548 = vmatpush1.bf16.msra.mxu0 0
        %549 = vmatprep.subr.bf16.mxu0 0
        %550 = vmatpush1.bf16.msra.mxu0 0
        %551 = vmatprep.subr.bf16.mxu0 0
        %552 = vmatpush1.bf16.msra.mxu0 0
        %553 = vmatprep.subr.bf16.mxu0 0
        %554 = vmatpush1.bf16.msra.mxu0 0
        %555 = vmatprep.mubr.bf16.mxu0 0
        %556 = vmatmul.mubr.bf16.gmra.mrb[0].mxu0 %v521
        %v557 = vpop.f32.mrb[0].mxu0
        %v558 = vadd.f32 %v462, %v557
        %v559 = vpop.f32.mrb[0].mxu0
        %v560 = vadd.f32 %v466, %v559
        %v561 = vpop.f32.mrb[0].mxu0
        %v562 = vpop.f32.mrb[0].mxu0
        %563 = vdwg.mxu0
        %564 = vmatprep.subr.bf16.mxu0 %v506
        %565 = vmatpush1.bf16.msra.mxu0 %v505
        %566 = vmatprep.subr.bf16.mxu0 %v510
        %567 = vmatpush1.bf16.msra.mxu0 %v509
        %568 = vmatprep.subr.bf16.mxu0 0
        %569 = vmatpush1.bf16.msra.mxu0 0
        %570 = vmatprep.subr.bf16.mxu0 0
        %571 = vmatpush1.bf16.msra.mxu0 0
        %572 = vmatprep.subr.bf16.mxu0 0
        %573 = vmatpush1.bf16.msra.mxu0 0
        %574 = vmatprep.subr.bf16.mxu0 0
        %575 = vmatpush1.bf16.msra.mxu0 0
        %576 = vmatprep.subr.bf16.mxu0 0
        %577 = vmatpush1.bf16.msra.mxu0 0
        %578 = vmatprep.subr.bf16.mxu0 0
        %579 = vmatpush1.bf16.msra.mxu0 0
        %580 = vmatprep.subr.bf16.mxu0 0
        %581 = vmatpush1.bf16.msra.mxu0 0
        %582 = vmatprep.subr.bf16.mxu0 0
        %583 = vmatpush1.bf16.msra.mxu0 0
        %584 = vmatprep.subr.bf16.mxu0 0
        %585 = vmatpush1.bf16.msra.mxu0 0
        %586 = vmatprep.subr.bf16.mxu0 0
        %587 = vmatpush1.bf16.msra.mxu0 0
        %588 = vmatprep.subr.bf16.mxu0 0
        %589 = vmatpush1.bf16.msra.mxu0 0
        %590 = vmatprep.subr.bf16.mxu0 0
        %591 = vmatpush1.bf16.msra.mxu0 0
        %592 = vmatprep.subr.bf16.mxu0 0
        %593 = vmatpush1.bf16.msra.mxu0 0
        %594 = vmatprep.subr.bf16.mxu0 0
        %595 = vmatpush1.bf16.msra.mxu0 0
        %596 = vmatprep.mubr.bf16.mxu0 0
        %597 = vmatmul.mubr.bf16.gmra.mrb[0].mxu0 %v521
        %v598 = vpop.f32.mrb[0].mxu0
        %v599 = vadd.f32 %v470, %v598
        %v600 = vpop.f32.mrb[0].mxu0
        %v601 = vadd.f32 %v474, %v600
        %v602 = vpop.f32.mrb[0].mxu0
        %v603 = vpop.f32.mrb[0].mxu0
        %604 = vdwg.mxu0
        %v605 = vld [vmem:[#allocation8] sm:$0xff]
        %v606 = vld [vmem:[#allocation8 + $0x8] sm:$0xff]
        %v607 = vld [vmem:[#allocation8 + $0x10] sm:$0xff]
        %v608 = vld [vmem:[#allocation8 + $0x18] sm:$0xff]
        %v609 = vld [vmem:[#allocation8 + $0x20] sm:$0xff]
        %v610 = vld [vmem:[#allocation8 + $0x28] sm:$0xff]
        %v611 = vld [vmem:[#allocation8 + $0x30] sm:$0xff]
        %v612 = vld [vmem:[#allocation8 + $0x38] sm:$0xff]
        %v613 = vld [vmem:[%s5] sm:$0xf]
        %v615 = vlaneseq
        %v616 = vshrl.u32 %v615, 7
        %v617 = vsub.s32 0, %v616
        %v618 = vrot.slane %v613, %v617
        %v619 = vlaneseq
        %v620 = vshrl.u32 %v619, 7
        %v621 = vsub.s32 1, %v620
        %v622 = vrot.slane %v613, %v621
        %v623 = vlaneseq
        %v624 = vshrl.u32 %v623, 7
        %v625 = vsub.s32 2, %v624
        %v626 = vrot.slane %v613, %v625
        %v627 = vlaneseq
        %v628 = vshrl.u32 %v627, 7
        %v629 = vsub.s32 3, %v628
        %v630 = vrot.slane %v613, %v629
        %v643 = vunpack.c.l.b16 %v605
        %v644 = vunpack.c.h.b16 %v605
        %v645 = vunpack.c.l.b16 %v606
        %v646 = vunpack.c.h.b16 %v606
        %v647 = vunpack.c.l.b16 %v607
        %v648 = vunpack.c.h.b16 %v607
        %v649 = vunpack.c.l.b16 %v608
        %v650 = vunpack.c.h.b16 %v608
        %v651 = vunpack.c.l.b16 %v609
        %v652 = vunpack.c.h.b16 %v609
        %v653 = vunpack.c.l.b16 %v610
        %v654 = vunpack.c.h.b16 %v610
        %v655 = vunpack.c.l.b16 %v611
        %v656 = vunpack.c.h.b16 %v611
        %v657 = vunpack.c.l.b16 %v612
        %v658 = vunpack.c.h.b16 %v612
        %v659 = vpack.c.b16 %v647, %v643
        %v660 = vpack.c.b16 %v648, %v644
        %v661 = vpack.c.b16 %v649, %v645
        %v662 = vpack.c.b16 %v650, %v646
        %v663 = vpack.c.b16 %v655, %v651
        %v664 = vpack.c.b16 %v656, %v652
        %v665 = vpack.c.b16 %v657, %v653
        %v666 = vpack.c.b16 %v658, %v654
        %675 = vmatprep.subr.bf16.mxu0 %v660
        %676 = vmatpush1.bf16.msra.mxu0 %v659
        %677 = vmatprep.subr.bf16.mxu0 %v664
        %678 = vmatpush1.bf16.msra.mxu0 %v663
        %679 = vmatprep.subr.bf16.mxu0 0
        %680 = vmatpush1.bf16.msra.mxu0 0
        %681 = vmatprep.subr.bf16.mxu0 0
        %682 = vmatpush1.bf16.msra.mxu0 0
        %683 = vmatprep.subr.bf16.mxu0 0
        %684 = vmatpush1.bf16.msra.mxu0 0
        %685 = vmatprep.subr.bf16.mxu0 0
        %686 = vmatpush1.bf16.msra.mxu0 0
        %687 = vmatprep.subr.bf16.mxu0 0
        %688 = vmatpush1.bf16.msra.mxu0 0
        %689 = vmatprep.subr.bf16.mxu0 0
        %690 = vmatpush1.bf16.msra.mxu0 0
        %691 = vmatprep.subr.bf16.mxu0 0
        %692 = vmatpush1.bf16.msra.mxu0 0
        %693 = vmatprep.subr.bf16.mxu0 0
        %694 = vmatpush1.bf16.msra.mxu0 0
        %695 = vmatprep.subr.bf16.mxu0 0
        %696 = vmatpush1.bf16.msra.mxu0 0
        %697 = vmatprep.subr.bf16.mxu0 0
        %698 = vmatpush1.bf16.msra.mxu0 0
        %699 = vmatprep.subr.bf16.mxu0 0
        %700 = vmatpush1.bf16.msra.mxu0 0
        %701 = vmatprep.subr.bf16.mxu0 0
        %702 = vmatpush1.bf16.msra.mxu0 0
        %703 = vmatprep.subr.bf16.mxu0 0
        %704 = vmatpush1.bf16.msra.mxu0 0
        %705 = vmatprep.subr.bf16.mxu0 0
        %706 = vmatpush1.bf16.msra.mxu0 0
        %707 = vmatprep.mubr.bf16.mxu0 0
        %708 = vmatmul.mubr.bf16.gmra.mrb[0].mxu0 %v521
        %v709 = vpop.f32.mrb[0].mxu0
        %v710 = vadd.f32 %v618, %v709
        %v711 = vpop.f32.mrb[0].mxu0
        %v712 = vadd.f32 %v622, %v711
        %v713 = vpop.f32.mrb[0].mxu0
        %v714 = vpop.f32.mrb[0].mxu0
        %715 = vdwg.mxu0
        %716 = vmatprep.subr.bf16.mxu0 %v662
        %717 = vmatpush1.bf16.msra.mxu0 %v661
        %718 = vmatprep.subr.bf16.mxu0 %v666
        %719 = vmatpush1.bf16.msra.mxu0 %v665
        %720 = vmatprep.subr.bf16.mxu0 0
        %721 = vmatpush1.bf16.msra.mxu0 0
        %722 = vmatprep.subr.bf16.mxu0 0
        %723 = vmatpush1.bf16.msra.mxu0 0
        %724 = vmatprep.subr.bf16.mxu0 0
        %725 = vmatpush1.bf16.msra.mxu0 0
        %726 = vmatprep.subr.bf16.mxu0 0
        %727 = vmatpush1.bf16.msra.mxu0 0
        %728 = vmatprep.subr.bf16.mxu0 0
        %729 = vmatpush1.bf16.msra.mxu0 0
        %730 = vmatprep.subr.bf16.mxu0 0
        %731 = vmatpush1.bf16.msra.mxu0 0
        %732 = vmatprep.subr.bf16.mxu0 0
        %733 = vmatpush1.bf16.msra.mxu0 0
        %734 = vmatprep.subr.bf16.mxu0 0
        %735 = vmatpush1.bf16.msra.mxu0 0
        %736 = vmatprep.subr.bf16.mxu0 0
        %737 = vmatpush1.bf16.msra.mxu0 0
        %738 = vmatprep.subr.bf16.mxu0 0
        %739 = vmatpush1.bf16.msra.mxu0 0
        %740 = vmatprep.subr.bf16.mxu0 0
        %741 = vmatpush1.bf16.msra.mxu0 0
        %742 = vmatprep.subr.bf16.mxu0 0
        %743 = vmatpush1.bf16.msra.mxu0 0
        %744 = vmatprep.subr.bf16.mxu0 0
        %745 = vmatpush1.bf16.msra.mxu0 0
        %746 = vmatprep.subr.bf16.mxu0 0
        %747 = vmatpush1.bf16.msra.mxu0 0
        %748 = vmatprep.mubr.bf16.mxu0 0
        %749 = vmatmul.mubr.bf16.gmra.mrb[0].mxu0 %v521
        %v750 = vpop.f32.mrb[0].mxu0
        %v751 = vadd.f32 %v626, %v750
        %v752 = vpop.f32.mrb[0].mxu0
        %v753 = vadd.f32 %v630, %v752
        %v754 = vpop.f32.mrb[0].mxu0
        %v755 = vpop.f32.mrb[0].mxu0
        %756 = vdwg.mxu0
        %v757 = vpack.c.bf16 %v558, %v558
        %v758 = vpack.c.bf16 %v560, %v560
        %v759 = vpack.c.bf16 %v599, %v599
        %v760 = vpack.c.bf16 %v601, %v601
        %v765 = vunpack.c.l.b16 %v757
        %v766 = vunpack.c.l.b16 %v758
        %v767 = vunpack.c.l.b16 %v759
        %v768 = vunpack.c.l.b16 %v760
        %v769 = vpack.c.b16 %v766, %v765
        %v770 = vpack.c.b16 %v768, %v767
        %773 = vst [vmem:[%s363] sm:$0xff] %v769
        %774 = vst [vmem:[%s363 + $0x8] sm:$0xff] %v770
        %v775 = vpack.c.bf16 %v710, %v710
        %v776 = vpack.c.bf16 %v712, %v712
        %v777 = vpack.c.bf16 %v751, %v751
        %v778 = vpack.c.bf16 %v753, %v753
        %v783 = vunpack.c.l.b16 %v775
        %v784 = vunpack.c.l.b16 %v776
        %v785 = vunpack.c.l.b16 %v777
        %v786 = vunpack.c.l.b16 %v778
        %v787 = vpack.c.b16 %v784, %v783
        %v788 = vpack.c.b16 %v786, %v785
        %791 = vst [vmem:[%s370] sm:$0xff] %v787
        %792 = vst [vmem:[%s370 + $0x8] sm:$0xff] %v788
        %s793 = sand.u32 %s176, 1
        %s794 = scalar_lea.sflag [#allocation4], %s793
        %s795 = sand.u32 %s176, 1
        %s796 = smul.addr %s795, 16
        %s797 = scalar_lea.vmem [#allocation10], %s796
        %s798 = sand.u32 %s202, 1
        %s799 = scalar_lea.sflag [#allocation12], %s798
        %s800 = sand.u32 %s202, 1
        %s801 = smul.addr %s800, 16
        %s802 = scalar_lea.vmem [#allocation11], %s801
        // Predicated region
        $region61: #{tpu_custom_call.1} parent=43 // pred_check
          %p803 = pneg %p186
        $region62: #{tpu_custom_call.1} parent=43 // pred_check_branch
          %805 = sbr.rel (%p803) target = $region64
        $region63: #{tpu_custom_call.1} parent=43 // pred_region
          %s807 = ssub.s32 256, 256
          %808 = vsyncadd %s794, %s807
          %s809 = smul.addr %s32, 4
          %s810 = smul.addr %s809, 64
          %s811 = scalar_lea.hbm %s6, %s810
          %s813 = sshll.u32 %s797, 4
          %s814 = int_to_ptr.vmem [resolvable:$true] %s813
          %816 = dma.vmem_to_hbm [thread:$0]  %s814, 256, %s811, %s794
        $region64: #{tpu_custom_call.1} parent=43 // pred_fallthru
          _
        // Predicated region
        $region65: #{tpu_custom_call.1} parent=43 // pred_check
          %p817 = pneg %p212
        $region66: #{tpu_custom_call.1} parent=43 // pred_check_branch
          %819 = sbr.rel (%p817) target = $region68
        $region67: #{tpu_custom_call.1} parent=43 // pred_region
          %s821 = ssub.s32 256, 256
          %822 = vsyncadd %s799, %s821
          %s823 = smul.addr %s32, 4
          %s824 = smul.addr %s823, 64
          %s825 = scalar_lea.hbm %s7, %s824
          %s827 = sshll.u32 %s802, 4
          %s828 = int_to_ptr.vmem [resolvable:$true] %s827
          %830 = dma.vmem_to_hbm [thread:$0]  %s828, 256, %s825, %s799
        $region68: #{tpu_custom_call.1} parent=43 // pred_fallthru
          _
      $region44: #{tpu_custom_call.1} parent=5 // pred_fallthru
        _
      %p831 = scmp.le.s32.totalorder 2, %s27
      // Predicated region
      $region69: #{tpu_custom_call.1} parent=5 // pred_check
        %p832 = pneg %p831
      $region70: #{tpu_custom_call.1} parent=5 // pred_check_branch
        %834 = sbr.rel (%p832) target = $region72
      $region71: #{tpu_custom_call.1} parent=5 // pred_region
        %s835 = ssub.s32 %s27, 2
        // Predicated region
        $region73: #{tpu_custom_call.1} parent=71 // pred_check
          %p836 = pneg %p192
        $region74: #{tpu_custom_call.1} parent=71 // pred_check_branch
          %838 = sbr.rel (%p836) target = $region76
        $region75: #{tpu_custom_call.1} parent=71 // pred_region
          %s839 = sand.u32 %s177, 1
          %s840 = scalar_lea.sflag [#allocation4], %s839
          %s841 = sand.u32 %s177, 1
          %s842 = smul.addr %s841, 16
          %s843 = scalar_lea.vmem [#allocation10], %s842
          %844 = dma.done %s840, 256
        $region76: #{tpu_custom_call.1} parent=71 // pred_fallthru
          _
        // Predicated region
        $region77: #{tpu_custom_call.1} parent=71 // pred_check
          %p845 = pneg %p218
        $region78: #{tpu_custom_call.1} parent=71 // pred_check_branch
          %847 = sbr.rel (%p845) target = $region80
        $region79: #{tpu_custom_call.1} parent=71 // pred_region
          %s848 = sand.u32 %s203, 1
          %s849 = scalar_lea.sflag [#allocation12], %s848
          %s850 = sand.u32 %s203, 1
          %s851 = smul.addr %s850, 16
          %s852 = scalar_lea.vmem [#allocation11], %s851
          %853 = dma.done %s849, 256
        $region80: #{tpu_custom_call.1} parent=71 // pred_fallthru
          _
      $region72: #{tpu_custom_call.1} parent=5 // pred_fallthru
        _
    $region6: #{tpu_custom_call.1} parent=1 // loop_footer
      %s31 = sadd.s32 1, %s27
    $region7: #{tpu_custom_call.1} parent=1 // loop_footer_branch
      %26 = sbr.rel target = $region3
    $region8: #{tpu_custom_call.1} parent=1 // loop_exit
      _
    %854 = vsyncpa [#allocation3], 1
    %s855 = scalar_lea.sflag [#allocation3], 1
    %856 = vsyncpa %s855, 1
    %857 = vsyncpa [#allocation6], 1
    %s858 = scalar_lea.sflag [#allocation6], 1
    %859 = vsyncpa %s858, 1
    %860 = vsyncpa [#allocation9], 1
    %861 = vsyncpa [#allocation4], 1
    %s862 = scalar_lea.sflag [#allocation4], 1
    %863 = vsyncpa %s862, 1
    %864 = vsyncpa [#allocation12], 1
    %s865 = scalar_lea.sflag [#allocation12], 1
    %866 = vsyncpa %s865, 1

</llo_original>
